<compile_context>
chip_gen: v7x
topology: tpu7x:2x2x1
jax: 0.10.0
libtpu: 0.0.40
codegen_flags: <defaults>
</compile_context>

<pallas_src>
import functools

import jax
import jax.numpy as jnp
from jax.experimental import pallas as pl
from jax.experimental.pallas import tpu as pltpu


_NEG_BIG = -1e30  # finite "-inf": masked lanes underflow to 0 in exp, no NaNs


def _info_nce_kernel(q_ref, k_ref, loss_ref, qn_ref, m_ref, l_ref, pos_ref,
                     *, n_valid, inv_temp, block_n):
    i = pl.program_id(0)          # query-row tile (parallel / megacore axis)
    j = pl.program_id(1)          # key tile (reduction axis, last in grid)

    # ---- init (first key tile of this row tile): normalize q once, zero accums
    @pl.when(j == 0)
    def _init():
        q = q_ref[...].astype(jnp.float32)
        inv_qn = jax.lax.rsqrt(jnp.sum(q * q, axis=-1, keepdims=True) + 1e-12)
        qn_ref[...] = (q * inv_qn).astype(qn_ref.dtype)
        m_ref[...] = jnp.full_like(m_ref, _NEG_BIG)
        l_ref[...] = jnp.zeros_like(l_ref)
        pos_ref[...] = jnp.zeros_like(pos_ref)

    # ---- normalize this key tile (rsqrt -> EUP slot; stays in VMEM)
    k = k_ref[...].astype(jnp.float32)
    inv_kn = jax.lax.rsqrt(jnp.sum(k * k, axis=-1, keepdims=True) + 1e-12)
    kn = (k * inv_kn).astype(qn_ref.dtype)

    # ---- similarity tile on the MXU: (block_n, D) x (block_n, D)^T, f32 acc.
    #      Transposed-RHS dot_general: no materialized transpose.
    s = jax.lax.dot_general(
        qn_ref[...], kn,
        dimension_numbers=(((1,), (1,)), ((), ())),
        preferred_element_type=jnp.float32) * inv_temp

    # mask padded (fake) key columns
    col = j * block_n + jax.lax.broadcasted_iota(jnp.int32, s.shape, 1)
    s = jnp.where(col < n_valid, s, _NEG_BIG)

    # ---- online logsumexp over key tiles
    m_prev = m_ref[...]
    m_new = jnp.maximum(m_prev, jnp.max(s, axis=-1, keepdims=True))
    p = jnp.exp(s - m_new)
    l_ref[...] = jnp.exp(m_prev - m_new) * l_ref[...] + jnp.sum(
        p, axis=-1, keepdims=True)
    m_ref[...] = m_new

    # ---- positive (diagonal) logits live only in the j == i tile
    @pl.when(j == i)
    def _diag():
        row = i * block_n + jax.lax.broadcasted_iota(jnp.int32, s.shape, 0)
        pos_ref[...] += jnp.sum(jnp.where(row == col, s, 0.0),
                                axis=-1, keepdims=True)

    # ---- finalize (last key tile): per-row loss, written exactly once
    @pl.when(j == pl.num_programs(1) - 1)
    def _finalize():
        loss_ref[...] = (m_ref[...] + jnp.log(l_ref[...])
                         - pos_ref[...]).astype(loss_ref.dtype)


def info_nce_loss(inputs, targets, *, temperature=0.1, block_n=128,
                  compute_dtype=jnp.float32):
    """InfoNCE loss. inputs, targets: (N, D). Returns a scalar f32 loss."""
    n, d = inputs.shape
    assert targets.shape == (n, d)

    # lane-dense padding: batch -> multiple of block_n, features -> multiple of 128
    n_pad = pl.cdiv(n, block_n) * block_n
    d_pad = pl.cdiv(d, 128) * 128

    q = inputs.astype(compute_dtype)
    k = targets.astype(compute_dtype)
    if (n_pad, d_pad) != (n, d):
        q = jnp.pad(q, ((0, n_pad - n), (0, d_pad - d)))
        k = jnp.pad(k, ((0, n_pad - n), (0, d_pad - d)))

    grid = (n_pad // block_n, n_pad // block_n)
    itemsize = jnp.dtype(compute_dtype).itemsize

    kernel = functools.partial(
        _info_nce_kernel, n_valid=n, inv_temp=1.0 / temperature, block_n=block_n)

    per_row = pl.pallas_call(
        kernel,
        out_shape=jax.ShapeDtypeStruct((n_pad, 1), jnp.float32),
        grid_spec=pltpu.PrefetchScalarGridSpec(
            num_scalar_prefetch=0,
            grid=grid,
            in_specs=[
                pl.BlockSpec((block_n, d_pad), lambda i, j: (i, 0)),   # queries
                pl.BlockSpec((block_n, d_pad), lambda i, j: (j, 0)),   # keys
            ],
            out_specs=pl.BlockSpec((block_n, 1), lambda i, j: (i, 0)),
            scratch_shapes=[
                pltpu.VMEM((block_n, d_pad), compute_dtype),  # normalized q tile
                pltpu.VMEM((block_n, 1), jnp.float32),        # running max
                pltpu.VMEM((block_n, 1), jnp.float32),        # running sum(exp)
                pltpu.VMEM((block_n, 1), jnp.float32),        # positive logit
            ],
        ),
        compiler_params=pltpu.CompilerParams(
            dimension_semantics=("parallel", "arbitrary")),
        cost_estimate=pl.CostEstimate(
            flops=2 * n_pad * n_pad * d_pad,
            transcendentals=n_pad * n_pad,
            bytes_accessed=(n_pad * d_pad * itemsize               # q, read once
                            + grid[0] * n_pad * d_pad * itemsize   # k, per row tile
                            + n_pad * 4)),                         # per-row losses
    )(q, k)

    return jnp.mean(per_row[:n, 0])


def _reference_info_nce(inputs, targets, temperature):
    """Pure-JAX reference (f32, high-precision matmul)."""
    q = inputs.astype(jnp.float32)
    t = targets.astype(jnp.float32)
    qn = q * jax.lax.rsqrt(jnp.sum(q * q, axis=-1, keepdims=True) + 1e-12)
    tn = t * jax.lax.rsqrt(jnp.sum(t * t, axis=-1, keepdims=True) + 1e-12)
    logits = jnp.dot(qn, tn.T, precision=jax.lax.Precision.HIGHEST) / temperature
    m = jnp.max(logits, axis=-1)
    lse = m + jnp.log(jnp.sum(jnp.exp(logits - m[:, None]), axis=-1))
    pos = jnp.diagonal(logits)
    return jnp.mean(lse - pos)


if __name__ == "__main__":
    key = jax.random.PRNGKey(0)
    k1, k2, k3, k4 = jax.random.split(key, 4)

    # small shapes implied by forward(inputs, targets): batch=8 pairs, hidden=32
    B, D = 8, 32
    inputs = jax.random.normal(k1, (B, D), dtype=jnp.float32)
    targets = jax.random.normal(k2, (B, D), dtype=jnp.float32)

    loss = jax.block_until_ready(info_nce_loss(inputs, targets, temperature=0.1))
    ref = _reference_info_nce(inputs, targets, 0.1)
    # MXU vs XLA matmul rounding may differ slightly; 2e-2 still catches any
    # structural bug (masking / diagonal / logsumexp errors would be O(1)).
    assert jnp.allclose(loss, ref, atol=2e-2, rtol=2e-2), (loss, ref)

    # exercise the multi-tile (2x2 grid) + padding path with small blocks
    B2, D2 = 12, 20
    x2 = jax.random.normal(k3, (B2, D2), dtype=jnp.float32)
    y2 = jax.random.normal(k4, (B2, D2), dtype=jnp.float32)
    loss2 = jax.block_until_ready(info_nce_loss(x2, y2, temperature=0.1, block_n=8))
    ref2 = _reference_info_nce(x2, y2, 0.1)
    assert jnp.allclose(loss2, ref2, atol=2e-2, rtol=2e-2), (loss2, ref2)

    # bf16 compute path (feeds the v6e/v7x bf16 MXU, halves DMA bytes)
    loss_bf16 = jax.block_until_ready(
        info_nce_loss(inputs, targets, temperature=0.1,
                      compute_dtype=jnp.bfloat16))
    assert jnp.allclose(loss_bf16, ref, atol=1e-1, rtol=1e-1), (loss_bf16, ref)

    print("KERNEL_OK")
</pallas_src>

<mosaic_0001>
module attributes {stable_mosaic.version = 11 : i64} {
  func.func @_info_nce_kernel(%arg0: i32, %arg1: i32, %arg2: memref<128x128xf32, #tpu.memory_space<vmem>>, %arg3: memref<128x128xf32, #tpu.memory_space<vmem>>, %arg4: memref<128x1xf32, #tpu.memory_space<vmem>>, %arg5: memref<128x128xf32, #tpu.memory_space<vmem>>, %arg6: memref<128x1xf32, #tpu.memory_space<vmem>>, %arg7: memref<128x1xf32, #tpu.memory_space<vmem>>, %arg8: memref<128x1xf32, #tpu.memory_space<vmem>>) attributes {dimension_semantics = [#tpu.dimension_semantics<parallel>, #tpu.dimension_semantics<arbitrary>], iteration_bounds = array<i64: 1, 1>, scalar_prefetch = 0 : i64, scratch_operands = 4 : i64, tpu.core_type = #tpu.core_type<tc>, window_params = [{transform_indices = @transform_0, window_bounds = array<i64: 128, 128>}, {transform_indices = @transform_1, window_bounds = array<i64: 128, 128>}, {transform_indices = @transform_2, window_bounds = array<i64: 128, 1>}]} {
    %c0_i32 = arith.constant 0 : i32
    %0 = arith.cmpi eq, %arg1, %c0_i32 : i32
    %1 = arith.extui %0 : i1 to i32
    %c0_i32_0 = arith.constant 0 : i32
    %2 = arith.cmpi ne, %1, %c0_i32_0 : i32
    scf.if %2 {
      %c0_21 = arith.constant 0 : index
      %c0_22 = arith.constant 0 : index
      %46 = vector.load %arg2[%c0_21, %c0_22] : memref<128x128xf32, #tpu.memory_space<vmem>>, vector<128x128xf32>
      %47 = arith.mulf %46, %46 : vector<128x128xf32>
      %cst_23 = arith.constant dense<0.000000e+00> : vector<128xf32>
      %48 = vector.multi_reduction <add>, %47, %cst_23 [1] : vector<128x128xf32> to vector<128xf32>
      %49 = vector.shape_cast %48 : vector<128xf32> to vector<128x1xf32>
      %cst_24 = arith.constant 9.99999996E-13 : f32
      %50 = vector.broadcast %cst_24 : f32 to vector<128x1xf32>
      %51 = arith.addf %49, %50 : vector<128x1xf32>
      %52 = math.rsqrt %51 : vector<128x1xf32>
      %53 = vector.broadcast %52 : vector<128x1xf32> to vector<128x128xf32>
      %54 = arith.mulf %46, %53 : vector<128x128xf32>
      %c0_25 = arith.constant 0 : index
      %c0_26 = arith.constant 0 : index
      %55 = vector.load %arg5[%c0_25, %c0_26] : memref<128x128xf32, #tpu.memory_space<vmem>>, vector<128x128xf32>
      tpu.vector_store %arg5[%c0_25, %c0_26], %54 {strides = array<i32>} : memref<128x128xf32, #tpu.memory_space<vmem>>, vector<128x128xf32>,
      %cst_27 = arith.constant -1.000000e+30 : f32
      %56 = vector.broadcast %cst_27 : f32 to vector<128x1xf32>
      %c0_28 = arith.constant 0 : index
      %c0_29 = arith.constant 0 : index
      %57 = vector.load %arg6[%c0_28, %c0_29] : memref<128x1xf32, #tpu.memory_space<vmem>>, vector<128x1xf32>
      tpu.vector_store %arg6[%c0_28, %c0_29], %56 {strides = array<i32>} : memref<128x1xf32, #tpu.memory_space<vmem>>, vector<128x1xf32>,
      %cst_30 = arith.constant 0.000000e+00 : f32
      %58 = vector.broadcast %cst_30 : f32 to vector<128x1xf32>
      %c0_31 = arith.constant 0 : index
      %c0_32 = arith.constant 0 : index
      %59 = vector.load %arg7[%c0_31, %c0_32] : memref<128x1xf32, #tpu.memory_space<vmem>>, vector<128x1xf32>
      tpu.vector_store %arg7[%c0_31, %c0_32], %58 {strides = array<i32>} : memref<128x1xf32, #tpu.memory_space<vmem>>, vector<128x1xf32>,
      %cst_33 = arith.constant 0.000000e+00 : f32
      %60 = vector.broadcast %cst_33 : f32 to vector<128x1xf32>
      %c0_34 = arith.constant 0 : index
      %c0_35 = arith.constant 0 : index
      %61 = vector.load %arg8[%c0_34, %c0_35] : memref<128x1xf32, #tpu.memory_space<vmem>>, vector<128x1xf32>
      tpu.vector_store %arg8[%c0_34, %c0_35], %60 {strides = array<i32>} : memref<128x1xf32, #tpu.memory_space<vmem>>, vector<128x1xf32>,
    } else {
    }
    %c0 = arith.constant 0 : index
    %c0_1 = arith.constant 0 : index
    %3 = vector.load %arg3[%c0, %c0_1] : memref<128x128xf32, #tpu.memory_space<vmem>>, vector<128x128xf32>
    %4 = arith.mulf %3, %3 : vector<128x128xf32>
    %cst = arith.constant dense<0.000000e+00> : vector<128xf32>
    %5 = vector.multi_reduction <add>, %4, %cst [1] : vector<128x128xf32> to vector<128xf32>
    %6 = vector.shape_cast %5 : vector<128xf32> to vector<128x1xf32>
    %cst_2 = arith.constant 9.99999996E-13 : f32
    %7 = vector.broadcast %cst_2 : f32 to vector<128x1xf32>
    %8 = arith.addf %6, %7 : vector<128x1xf32>
    %9 = math.rsqrt %8 : vector<128x1xf32>
    %10 = vector.broadcast %9 : vector<128x1xf32> to vector<128x128xf32>
    %11 = arith.mulf %3, %10 : vector<128x128xf32>
    %c0_3 = arith.constant 0 : index
    %c0_4 = arith.constant 0 : index
    %12 = vector.load %arg5[%c0_3, %c0_4] : memref<128x128xf32, #tpu.memory_space<vmem>>, vector<128x128xf32>
    %cst_5 = arith.constant dense<0.000000e+00> : vector<128x128xf32>
    %13 = tpu.matmul %12, %11, %cst_5 {dimension_numbers = #tpu.dot_dimension_numbers<[1], [1], [0], [0], [0, 0, 1, 0], [], []>} : vector<128x128xf32>, vector<128x128xf32>, vector<128x128xf32> -> vector<128x128xf32>
    %cst_6 = arith.constant 1.000000e+01 : f32
    %14 = vector.broadcast %cst_6 : f32 to vector<128x128xf32>
    %15 = arith.mulf %13, %14 : vector<128x128xf32>
    %c128_i32 = arith.constant 128 : i32
    %16 = arith.muli %arg1, %c128_i32 : i32
    %17 = tpu.iota {dimensions = array<i32: 1>} : vector<128x128xi32>
    %18 = vector.broadcast %16 : i32 to vector<128x128xi32>
    %19 = arith.addi %18, %17 : vector<128x128xi32>
    %c8_i32 = arith.constant 8 : i32
    %20 = vector.broadcast %c8_i32 : i32 to vector<128x128xi32>
    %21 = arith.cmpi slt, %19, %20 : vector<128x128xi32>
    %cst_7 = arith.constant -1.000000e+30 : f32
    %22 = vector.broadcast %cst_7 : f32 to vector<128x128xf32>
    %23 = arith.select %21, %15, %22 : vector<128x128xi1>, vector<128x128xf32>
    %c0_8 = arith.constant 0 : index
    %c0_9 = arith.constant 0 : index
    %24 = vector.load %arg6[%c0_8, %c0_9] : memref<128x1xf32, #tpu.memory_space<vmem>>, vector<128x1xf32>
    %cst_10 = arith.constant dense<0xFF800000> : vector<128xf32>
    %25 = vector.multi_reduction <maximumf>, %23, %cst_10 [1] : vector<128x128xf32> to vector<128xf32>
    %26 = vector.shape_cast %25 : vector<128xf32> to vector<128x1xf32>
    %27 = arith.maximumf %24, %26 : vector<128x1xf32>
    %28 = vector.broadcast %27 : vector<128x1xf32> to vector<128x128xf32>
    %29 = arith.subf %23, %28 : vector<128x128xf32>
    %30 = math.exp %29 : vector<128x128xf32>
    %31 = arith.subf %24, %27 : vector<128x1xf32>
    %32 = math.exp %31 : vector<128x1xf32>
    %c0_11 = arith.constant 0 : index
    %c0_12 = arith.constant 0 : index
    %33 = vector.load %arg7[%c0_11, %c0_12] : memref<128x1xf32, #tpu.memory_space<vmem>>, vector<128x1xf32>
    %34 = arith.mulf %32, %33 : vector<128x1xf32>
    %cst_13 = arith.constant dense<0.000000e+00> : vector<128xf32>
    %35 = vector.multi_reduction <add>, %30, %cst_13 [1] : vector<128x128xf32> to vector<128xf32>
    %36 = vector.shape_cast %35 : vector<128xf32> to vector<128x1xf32>
    %37 = arith.addf %34, %36 : vector<128x1xf32>
    %c0_14 = arith.constant 0 : index
    %c0_15 = arith.constant 0 : index
    %38 = vector.load %arg7[%c0_14, %c0_15] : memref<128x1xf32, #tpu.memory_space<vmem>>, vector<128x1xf32>
    tpu.vector_store %arg7[%c0_14, %c0_15], %37 {strides = array<i32>} : memref<128x1xf32, #tpu.memory_space<vmem>>, vector<128x1xf32>,
    %c0_16 = arith.constant 0 : index
    %c0_17 = arith.constant 0 : index
    %39 = vector.load %arg6[%c0_16, %c0_17] : memref<128x1xf32, #tpu.memory_space<vmem>>, vector<128x1xf32>
    tpu.vector_store %arg6[%c0_16, %c0_17], %27 {strides = array<i32>} : memref<128x1xf32, #tpu.memory_space<vmem>>, vector<128x1xf32>,
    %40 = arith.cmpi eq, %arg1, %arg0 : i32
    %41 = arith.extui %40 : i1 to i32
    %c0_i32_18 = arith.constant 0 : i32
    %42 = arith.cmpi ne, %41, %c0_i32_18 : i32
    scf.if %42 {
      %c128_i32_21 = arith.constant 128 : i32
      %46 = arith.muli %arg0, %c128_i32_21 : i32
      %47 = tpu.iota {dimensions = array<i32: 0>} : vector<128x128xi32>
      %48 = vector.broadcast %46 : i32 to vector<128x128xi32>
      %49 = arith.addi %48, %47 : vector<128x128xi32>
      %c0_22 = arith.constant 0 : index
      %c0_23 = arith.constant 0 : index
      %50 = vector.load %arg8[%c0_22, %c0_23] : memref<128x1xf32, #tpu.memory_space<vmem>>, vector<128x1xf32>
      %51 = arith.cmpi eq, %49, %19 : vector<128x128xi32>
      %cst_24 = arith.constant 0.000000e+00 : f32
      %52 = vector.broadcast %cst_24 : f32 to vector<128x128xf32>
      %53 = arith.select %51, %23, %52 : vector<128x128xi1>, vector<128x128xf32>
      %cst_25 = arith.constant dense<0.000000e+00> : vector<128xf32>
      %54 = vector.multi_reduction <add>, %53, %cst_25 [1] : vector<128x128xf32> to vector<128xf32>
      %55 = vector.shape_cast %54 : vector<128xf32> to vector<128x1xf32>
      %56 = arith.addf %50, %55 : vector<128x1xf32>
      %c0_26 = arith.constant 0 : index
      %c0_27 = arith.constant 0 : index
      %57 = vector.load %arg8[%c0_26, %c0_27] : memref<128x1xf32, #tpu.memory_space<vmem>>, vector<128x1xf32>
      tpu.vector_store %arg8[%c0_26, %c0_27], %56 {strides = array<i32>} : memref<128x1xf32, #tpu.memory_space<vmem>>, vector<128x1xf32>,
    } else {
    }
    %c0_i32_19 = arith.constant 0 : i32
    %43 = arith.cmpi eq, %arg1, %c0_i32_19 : i32
    %44 = arith.extui %43 : i1 to i32
    %c0_i32_20 = arith.constant 0 : i32
    %45 = arith.cmpi ne, %44, %c0_i32_20 : i32
    scf.if %45 {
      %c0_21 = arith.constant 0 : index
      %c0_22 = arith.constant 0 : index
      %46 = vector.load %arg6[%c0_21, %c0_22] : memref<128x1xf32, #tpu.memory_space<vmem>>, vector<128x1xf32>
      %c0_23 = arith.constant 0 : index
      %c0_24 = arith.constant 0 : index
      %47 = vector.load %arg7[%c0_23, %c0_24] : memref<128x1xf32, #tpu.memory_space<vmem>>, vector<128x1xf32>
      %48 = math.log %47 : vector<128x1xf32>
      %49 = arith.addf %46, %48 : vector<128x1xf32>
      %c0_25 = arith.constant 0 : index
      %c0_26 = arith.constant 0 : index
      %50 = vector.load %arg8[%c0_25, %c0_26] : memref<128x1xf32, #tpu.memory_space<vmem>>, vector<128x1xf32>
      %51 = arith.subf %49, %50 : vector<128x1xf32>
      %c0_27 = arith.constant 0 : index
      %c0_28 = arith.constant 0 : index
      %52 = vector.load %arg4[%c0_27, %c0_28] : memref<128x1xf32, #tpu.memory_space<vmem>>, vector<128x1xf32>
      tpu.vector_store %arg4[%c0_27, %c0_28], %51 {strides = array<i32>} : memref<128x1xf32, #tpu.memory_space<vmem>>, vector<128x1xf32>,
    } else {
    }
    return
  }
  func.func @transform_0(%arg0: i32, %arg1: i32) -> (i32, i32) {
    %c0_i32 = arith.constant 0 : i32
    %c0_i32_0 = arith.constant 0 : i32
    return %arg0, %c0_i32 : i32, i32
  }
  func.func @transform_1(%arg0: i32, %arg1: i32) -> (i32, i32) {
    %c0_i32 = arith.constant 0 : i32
    %c0_i32_0 = arith.constant 0 : i32
    return %arg1, %c0_i32 : i32, i32
  }
  func.func @transform_2(%arg0: i32, %arg1: i32) -> (i32, i32) {
    %c0_i32 = arith.constant 0 : i32
    %c0_i32_0 = arith.constant 0 : i32
    return %arg0, %c0_i32 : i32, i32
  }
}

</mosaic_0001>

<llo_original>
// kernel: tpu_custom_call.1
$region0: #{tpu_custom_call.1}
  #allocation0 [shape = 'u32[]', space=smem, size = 0x4, offset = 0x4, fixed_abs, tag = 'smem constant byte address 0x4 - core index']
  #allocation1 [shape = 'u32[144,128]{1,0:T(1,128)}', space=vmem, size = 0x12000, scoped, tag = 'internal scratch']
  #allocation2 [shape = 'f32[128,128]{1,0:T(8,128)}', space=vmem, size = 0x10000, scoped, tag = 'scratch operand']
  #allocation3 [shape = 'f32[128,1]{1,0:T(8,128)}', space=vmem, size = 0x10000, scoped, tag = 'scratch operand']
  #allocation4 [shape = 'f32[128,1]{1,0:T(8,128)}', space=vmem, size = 0x10000, scoped, tag = 'scratch operand']
  #allocation5 [shape = 'f32[128,1]{1,0:T(8,128)}', space=vmem, size = 0x10000, scoped, tag = 'scratch operand']
  %s0 = inlined_call_operand.hbm [shape: f32[128,128], index: 0, kind: input, shape index: {}]
  %s1 = inlined_call_operand.hbm [shape: f32[128,128], index: 1, kind: input, shape index: {}]
  %s2 = inlined_call_operand.vmem [shape: f32[128,1], index: 2, kind: output, shape index: {}]
  %s3 = sld [smem:[#allocation0]]
  $region38: #{tpu_custom_call.1} parent=0
    _
  %s5 = ssub.s32 1, %s3
  %s6 = scalar_select 0, %s5, %s3
  $region1: #{tpu_custom_call.1} parent=0
    #allocation6 [shape = 'u8[65536]{0}', space=vmem, size = 0x10000, scoped, tag = 'input window, operand 0, single buffered']
    #allocation7 [shape = 's32[1]{0}', space=sflag, size = 0x4, scoped, tag = 'scoped memory for tpu_custom_call.1']
    #allocation8 [shape = 'u8[65536]{0}', space=vmem, size = 0x10000, scoped, tag = 'input window, operand 1, single buffered']
    #allocation9 [shape = 's32[1]{0}', space=sflag, size = 0x4, scoped, tag = 'scoped memory for tpu_custom_call.1']
    %7 = vsyncpa [#allocation7], 0
    %8 = vsyncpa [#allocation9], 0
    // Predicated region
    $region2: #{tpu_custom_call.1} parent=1 // pred_check
      _
    $region3: #{tpu_custom_call.1} parent=1 // pred_check_branch
      %10 = sbr.rel (0) target = $region5
    $region4: #{tpu_custom_call.1} parent=1 // pred_region
      %s12 = ssub.s32 2048, 2048
      %13 = vsyncadd [#allocation7], %s12
      %s14 = sshll.u32 [#allocation6], 4
      %s15 = int_to_ptr.vmem [resolvable:$true] %s14
      %20 = dma.hbm_to_vmem [thread:$0]  %s0, 2048, %s15, [#allocation7], 128, 128, 8
    $region5: #{tpu_custom_call.1} parent=1 // pred_fallthru
      _
    // Predicated region
    $region6: #{tpu_custom_call.1} parent=1 // pred_check
      _
    $region7: #{tpu_custom_call.1} parent=1 // pred_check_branch
      %22 = sbr.rel (0) target = $region9
    $region8: #{tpu_custom_call.1} parent=1 // pred_region
      %s24 = ssub.s32 2048, 2048
      %25 = vsyncadd [#allocation9], %s24
      %s26 = sshll.u32 [#allocation8], 4
      %s27 = int_to_ptr.vmem [resolvable:$true] %s26
      %32 = dma.hbm_to_vmem [thread:$0]  %s1, 2048, %s27, [#allocation9], 128, 128, 8
    $region9: #{tpu_custom_call.1} parent=1 // pred_fallthru
      _
    // Predicated region
    $region10: #{tpu_custom_call.1} parent=1 // pred_check
      _
    $region11: #{tpu_custom_call.1} parent=1 // pred_check_branch
      %34 = sbr.rel (0) target = $region13
    $region12: #{tpu_custom_call.1} parent=1 // pred_region
      %35 = dma.done [#allocation7], 2048
    $region13: #{tpu_custom_call.1} parent=1 // pred_fallthru
      _
    // Predicated region
    $region14: #{tpu_custom_call.1} parent=1 // pred_check
      _
    $region15: #{tpu_custom_call.1} parent=1 // pred_check_branch
      %37 = sbr.rel (0) target = $region17
    $region16: #{tpu_custom_call.1} parent=1 // pred_region
      %38 = dma.done [#allocation9], 2048
    $region17: #{tpu_custom_call.1} parent=1 // pred_fallthru
      _
    %p39 = scmp.eq.s32.totalorder 0, 0
    // Predicated region
    $region18: #{tpu_custom_call.1} parent=1 // pred_check
      %p40 = pneg %p39
    $region19: #{tpu_custom_call.1} parent=1 // pred_check_branch
      %42 = sbr.rel (%p40) target = $region21
    $region20: #{tpu_custom_call.1} parent=1 // pred_region
      %v43 = vld [vmem:[#allocation6] sm:$0xff]
      %v44 = vld [vmem:[#allocation6 + $0x8] sm:$0xff]
      %v45 = vld [vmem:[#allocation6 + $0x10] sm:$0xff]
      %v46 = vld [vmem:[#allocation6 + $0x18] sm:$0xff]
      %v47 = vld [vmem:[#allocation6 + $0x20] sm:$0xff]
      %v48 = vld [vmem:[#allocation6 + $0x28] sm:$0xff]
      %v49 = vld [vmem:[#allocation6 + $0x30] sm:$0xff]
      %v50 = vld [vmem:[#allocation6 + $0x38] sm:$0xff]
      %v51 = vld [vmem:[#allocation6 + $0x40] sm:$0xff]
      %v52 = vld [vmem:[#allocation6 + $0x48] sm:$0xff]
      %v53 = vld [vmem:[#allocation6 + $0x50] sm:$0xff]
      %v54 = vld [vmem:[#allocation6 + $0x58] sm:$0xff]
      %v55 = vld [vmem:[#allocation6 + $0x60] sm:$0xff]
      %v56 = vld [vmem:[#allocation6 + $0x68] sm:$0xff]
      %v57 = vld [vmem:[#allocation6 + $0x70] sm:$0xff]
      %v58 = vld [vmem:[#allocation6 + $0x78] sm:$0xff]
      %v59 = vmul.f32 %v43, %v43
      %v60 = vmul.f32 %v44, %v44
      %v61 = vmul.f32 %v45, %v45
      %v62 = vmul.f32 %v46, %v46
      %v63 = vmul.f32 %v47, %v47
      %v64 = vmul.f32 %v48, %v48
      %v65 = vmul.f32 %v49, %v49
      %v66 = vmul.f32 %v50, %v50
      %v67 = vmul.f32 %v51, %v51
      %v68 = vmul.f32 %v52, %v52
      %v69 = vmul.f32 %v53, %v53
      %v70 = vmul.f32 %v54, %v54
      %v71 = vmul.f32 %v55, %v55
      %v72 = vmul.f32 %v56, %v56
      %v73 = vmul.f32 %v57, %v57
      %v74 = vmul.f32 %v58, %v58
      %75 = vadd.xlane.f32.xlu0 %v59
      %v76 = vpop.xlane.xlu0 %75
      %77 = vadd.xlane.f32.xlu0 %v60
      %v78 = vpop.xlane.xlu0 %77
      %79 = vadd.xlane.f32.xlu0 %v61
      %v80 = vpop.xlane.xlu0 %79
      %81 = vadd.xlane.f32.xlu0 %v62
      %v82 = vpop.xlane.xlu0 %81
      %83 = vadd.xlane.f32.xlu0 %v63
      %v84 = vpop.xlane.xlu0 %83
      %85 = vadd.xlane.f32.xlu0 %v64
      %v86 = vpop.xlane.xlu0 %85
      %87 = vadd.xlane.f32.xlu0 %v65
      %v88 = vpop.xlane.xlu0 %87
      %89 = vadd.xlane.f32.xlu0 %v66
      %v90 = vpop.xlane.xlu0 %89
      %91 = vadd.xlane.f32.xlu0 %v67
      %v92 = vpop.xlane.xlu0 %91
      %93 = vadd.xlane.f32.xlu0 %v68
      %v94 = vpop.xlane.xlu0 %93
      %95 = vadd.xlane.f32.xlu0 %v69
      %v96 = vpop.xlane.xlu0 %95
      %97 = vadd.xlane.f32.xlu0 %v70
      %v98 = vpop.xlane.xlu0 %97
      %99 = vadd.xlane.f32.xlu0 %v71
      %v100 = vpop.xlane.xlu0 %99
      %101 = vadd.xlane.f32.xlu0 %v72
      %v102 = vpop.xlane.xlu0 %101
      %103 = vadd.xlane.f32.xlu0 %v73
      %v104 = vpop.xlane.xlu0 %103
      %105 = vadd.xlane.f32.xlu0 %v74
      %v106 = vpop.xlane.xlu0 %105
      %v107 = vadd.f32 %v76, 1e-12
      %v108 = vadd.f32 %v78, 1e-12
      %v109 = vadd.f32 %v80, 1e-12
      %v110 = vadd.f32 %v82, 1e-12
      %v111 = vadd.f32 %v84, 1e-12
      %v112 = vadd.f32 %v86, 1e-12
      %v113 = vadd.f32 %v88, 1e-12
      %v114 = vadd.f32 %v90, 1e-12
      %v115 = vadd.f32 %v92, 1e-12
      %v116 = vadd.f32 %v94, 1e-12
      %v117 = vadd.f32 %v96, 1e-12
      %v118 = vadd.f32 %v98, 1e-12
      %v119 = vadd.f32 %v100, 1e-12
      %v120 = vadd.f32 %v102, 1e-12
      %v121 = vadd.f32 %v104, 1e-12
      %v122 = vadd.f32 %v106, 1e-12
      %v123 = vrsqrt.pop %v107
      %v124 = vrsqrt.pop %v108
      %v125 = vrsqrt.pop %v109
      %v126 = vrsqrt.pop %v110
      %v127 = vrsqrt.pop %v111
      %v128 = vrsqrt.pop %v112
      %v129 = vrsqrt.pop %v113
      %v130 = vrsqrt.pop %v114
      %v131 = vrsqrt.pop %v115
      %v132 = vrsqrt.pop %v116
      %v133 = vrsqrt.pop %v117
      %v134 = vrsqrt.pop %v118
      %v135 = vrsqrt.pop %v119
      %v136 = vrsqrt.pop %v120
      %v137 = vrsqrt.pop %v121
      %v138 = vrsqrt.pop %v122
      %v139 = vmul.f32 %v43, %v123
      %v140 = vmul.f32 %v44, %v124
      %v141 = vmul.f32 %v45, %v125
      %v142 = vmul.f32 %v46, %v126
      %v143 = vmul.f32 %v47, %v127
      %v144 = vmul.f32 %v48, %v128
      %v145 = vmul.f32 %v49, %v129
      %v146 = vmul.f32 %v50, %v130
      %v147 = vmul.f32 %v51, %v131
      %v148 = vmul.f32 %v52, %v132
      %v149 = vmul.f32 %v53, %v133
      %v150 = vmul.f32 %v54, %v134
      %v151 = vmul.f32 %v55, %v135
      %v152 = vmul.f32 %v56, %v136
      %v153 = vmul.f32 %v57, %v137
      %v154 = vmul.f32 %v58, %v138
      %155 = vst [vmem:[#allocation2] sm:$0xff] %v139
      %156 = vst [vmem:[#allocation2 + $0x8] sm:$0xff] %v140
      %157 = vst [vmem:[#allocation2 + $0x10] sm:$0xff] %v141
      %158 = vst [vmem:[#allocation2 + $0x18] sm:$0xff] %v142
      %159 = vst [vmem:[#allocation2 + $0x20] sm:$0xff] %v143
      %160 = vst [vmem:[#allocation2 + $0x28] sm:$0xff] %v144
      %161 = vst [vmem:[#allocation2 + $0x30] sm:$0xff] %v145
      %162 = vst [vmem:[#allocation2 + $0x38] sm:$0xff] %v146
      %163 = vst [vmem:[#allocation2 + $0x40] sm:$0xff] %v147
      %164 = vst [vmem:[#allocation2 + $0x48] sm:$0xff] %v148
      %165 = vst [vmem:[#allocation2 + $0x50] sm:$0xff] %v149
      %166 = vst [vmem:[#allocation2 + $0x58] sm:$0xff] %v150
      %167 = vst [vmem:[#allocation2 + $0x60] sm:$0xff] %v151
      %168 = vst [vmem:[#allocation2 + $0x68] sm:$0xff] %v152
      %169 = vst [vmem:[#allocation2 + $0x70] sm:$0xff] %v153
      %170 = vst [vmem:[#allocation2 + $0x78] sm:$0xff] %v154
      %vm171 = vcmask 7168
      %172 = vst.msk [vmem:[#allocation3] sm:$0xff] %vm171, -1e+30
      %173 = vst.msk [vmem:[#allocation3 + $0x8] sm:$0xff] %vm171, -1e+30
      %174 = vst.msk [vmem:[#allocation3 + $0x10] sm:$0xff] %vm171, -1e+30
      %175 = vst.msk [vmem:[#allocation3 + $0x18] sm:$0xff] %vm171, -1e+30
      %176 = vst.msk [vmem:[#allocation3 + $0x20] sm:$0xff] %vm171, -1e+30
      %177 = vst.msk [vmem:[#allocation3 + $0x28] sm:$0xff] %vm171, -1e+30
      %178 = vst.msk [vmem:[#allocation3 + $0x30] sm:$0xff] %vm171, -1e+30
      %179 = vst.msk [vmem:[#allocation3 + $0x38] sm:$0xff] %vm171, -1e+30
      %180 = vst.msk [vmem:[#allocation3 + $0x40] sm:$0xff] %vm171, -1e+30
      %181 = vst.msk [vmem:[#allocation3 + $0x48] sm:$0xff] %vm171, -1e+30
      %182 = vst.msk [vmem:[#allocation3 + $0x50] sm:$0xff] %vm171, -1e+30
      %183 = vst.msk [vmem:[#allocation3 + $0x58] sm:$0xff] %vm171, -1e+30
      %184 = vst.msk [vmem:[#allocation3 + $0x60] sm:$0xff] %vm171, -1e+30
      %185 = vst.msk [vmem:[#allocation3 + $0x68] sm:$0xff] %vm171, -1e+30
      %186 = vst.msk [vmem:[#allocation3 + $0x70] sm:$0xff] %vm171, -1e+30
      %187 = vst.msk [vmem:[#allocation3 + $0x78] sm:$0xff] %vm171, -1e+30
      %188 = vst.msk [vmem:[#allocation4] sm:$0xff] %vm171, 0.0
      %189 = vst.msk [vmem:[#allocation4 + $0x8] sm:$0xff] %vm171, 0.0
      %190 = vst.msk [vmem:[#allocation4 + $0x10] sm:$0xff] %vm171, 0.0
      %191 = vst.msk [vmem:[#allocation4 + $0x18] sm:$0xff] %vm171, 0.0
      %192 = vst.msk [vmem:[#allocation4 + $0x20] sm:$0xff] %vm171, 0.0
      %193 = vst.msk [vmem:[#allocation4 + $0x28] sm:$0xff] %vm171, 0.0
      %194 = vst.msk [vmem:[#allocation4 + $0x30] sm:$0xff] %vm171, 0.0
      %195 = vst.msk [vmem:[#allocation4 + $0x38] sm:$0xff] %vm171, 0.0
      %196 = vst.msk [vmem:[#allocation4 + $0x40] sm:$0xff] %vm171, 0.0
      %197 = vst.msk [vmem:[#allocation4 + $0x48] sm:$0xff] %vm171, 0.0
      %198 = vst.msk [vmem:[#allocation4 + $0x50] sm:$0xff] %vm171, 0.0
      %199 = vst.msk [vmem:[#allocation4 + $0x58] sm:$0xff] %vm171, 0.0
      %200 = vst.msk [vmem:[#allocation4 + $0x60] sm:$0xff] %vm171, 0.0
      %201 = vst.msk [vmem:[#allocation4 + $0x68] sm:$0xff] %vm171, 0.0
      %202 = vst.msk [vmem:[#allocation4 + $0x70] sm:$0xff] %vm171, 0.0
      %203 = vst.msk [vmem:[#allocation4 + $0x78] sm:$0xff] %vm171, 0.0
      %204 = vst.msk [vmem:[#allocation5] sm:$0xff] %vm171, 0.0
      %205 = vst.msk [vmem:[#allocation5 + $0x8] sm:$0xff] %vm171, 0.0
      %206 = vst.msk [vmem:[#allocation5 + $0x10] sm:$0xff] %vm171, 0.0
      %207 = vst.msk [vmem:[#allocation5 + $0x18] sm:$0xff] %vm171, 0.0
      %208 = vst.msk [vmem:[#allocation5 + $0x20] sm:$0xff] %vm171, 0.0
      %209 = vst.msk [vmem:[#allocation5 + $0x28] sm:$0xff] %vm171, 0.0
      %210 = vst.msk [vmem:[#allocation5 + $0x30] sm:$0xff] %vm171, 0.0
      %211 = vst.msk [vmem:[#allocation5 + $0x38] sm:$0xff] %vm171, 0.0
      %212 = vst.msk [vmem:[#allocation5 + $0x40] sm:$0xff] %vm171, 0.0
      %213 = vst.msk [vmem:[#allocation5 + $0x48] sm:$0xff] %vm171, 0.0
      %214 = vst.msk [vmem:[#allocation5 + $0x50] sm:$0xff] %vm171, 0.0
      %215 = vst.msk [vmem:[#allocation5 + $0x58] sm:$0xff] %vm171, 0.0
      %216 = vst.msk [vmem:[#allocation5 + $0x60] sm:$0xff] %vm171, 0.0
      %217 = vst.msk [vmem:[#allocation5 + $0x68] sm:$0xff] %vm171, 0.0
      %218 = vst.msk [vmem:[#allocation5 + $0x70] sm:$0xff] %vm171, 0.0
      %219 = vst.msk [vmem:[#allocation5 + $0x78] sm:$0xff] %vm171, 0.0
    $region21: #{tpu_custom_call.1} parent=1 // pred_fallthru
      _
    %v220 = vld [vmem:[#allocation8] sm:$0xff]
    %v221 = vld [vmem:[#allocation8 + $0x8] sm:$0xff]
    %v222 = vld [vmem:[#allocation8 + $0x10] sm:$0xff]
    %v223 = vld [vmem:[#allocation8 + $0x18] sm:$0xff]
    %v224 = vld [vmem:[#allocation8 + $0x20] sm:$0xff]
    %v225 = vld [vmem:[#allocation8 + $0x28] sm:$0xff]
    %v226 = vld [vmem:[#allocation8 + $0x30] sm:$0xff]
    %v227 = vld [vmem:[#allocation8 + $0x38] sm:$0xff]
    %v228 = vld [vmem:[#allocation8 + $0x40] sm:$0xff]
    %v229 = vld [vmem:[#allocation8 + $0x48] sm:$0xff]
    %v230 = vld [vmem:[#allocation8 + $0x50] sm:$0xff]
    %v231 = vld [vmem:[#allocation8 + $0x58] sm:$0xff]
    %v232 = vld [vmem:[#allocation8 + $0x60] sm:$0xff]
    %v233 = vld [vmem:[#allocation8 + $0x68] sm:$0xff]
    %v234 = vld [vmem:[#allocation8 + $0x70] sm:$0xff]
    %v235 = vld [vmem:[#allocation8 + $0x78] sm:$0xff]
    %v236 = vmul.f32 %v220, %v220
    %v237 = vmul.f32 %v221, %v221
    %v238 = vmul.f32 %v222, %v222
    %v239 = vmul.f32 %v223, %v223
    %v240 = vmul.f32 %v224, %v224
    %v241 = vmul.f32 %v225, %v225
    %v242 = vmul.f32 %v226, %v226
    %v243 = vmul.f32 %v227, %v227
    %v244 = vmul.f32 %v228, %v228
    %v245 = vmul.f32 %v229, %v229
    %v246 = vmul.f32 %v230, %v230
    %v247 = vmul.f32 %v231, %v231
    %v248 = vmul.f32 %v232, %v232
    %v249 = vmul.f32 %v233, %v233
    %v250 = vmul.f32 %v234, %v234
    %v251 = vmul.f32 %v235, %v235
    %252 = vadd.xlane.f32.xlu0 %v236
    %v253 = vpop.xlane.xlu0 %252
    %254 = vadd.xlane.f32.xlu0 %v237
    %v255 = vpop.xlane.xlu0 %254
    %256 = vadd.xlane.f32.xlu0 %v238
    %v257 = vpop.xlane.xlu0 %256
    %258 = vadd.xlane.f32.xlu0 %v239
    %v259 = vpop.xlane.xlu0 %258
    %260 = vadd.xlane.f32.xlu0 %v240
    %v261 = vpop.xlane.xlu0 %260
    %262 = vadd.xlane.f32.xlu0 %v241
    %v263 = vpop.xlane.xlu0 %262
    %264 = vadd.xlane.f32.xlu0 %v242
    %v265 = vpop.xlane.xlu0 %264
    %266 = vadd.xlane.f32.xlu0 %v243
    %v267 = vpop.xlane.xlu0 %266
    %268 = vadd.xlane.f32.xlu0 %v244
    %v269 = vpop.xlane.xlu0 %268
    %270 = vadd.xlane.f32.xlu0 %v245
    %v271 = vpop.xlane.xlu0 %270
    %272 = vadd.xlane.f32.xlu0 %v246
    %v273 = vpop.xlane.xlu0 %272
    %274 = vadd.xlane.f32.xlu0 %v247
    %v275 = vpop.xlane.xlu0 %274
    %276 = vadd.xlane.f32.xlu0 %v248
    %v277 = vpop.xlane.xlu0 %276
    %278 = vadd.xlane.f32.xlu0 %v249
    %v279 = vpop.xlane.xlu0 %278
    %280 = vadd.xlane.f32.xlu0 %v250
    %v281 = vpop.xlane.xlu0 %280
    %282 = vadd.xlane.f32.xlu0 %v251
    %v283 = vpop.xlane.xlu0 %282
    %v284 = vadd.f32 %v253, 1e-12
    %v285 = vadd.f32 %v255, 1e-12
    %v286 = vadd.f32 %v257, 1e-12
    %v287 = vadd.f32 %v259, 1e-12
    %v288 = vadd.f32 %v261, 1e-12
    %v289 = vadd.f32 %v263, 1e-12
    %v290 = vadd.f32 %v265, 1e-12
    %v291 = vadd.f32 %v267, 1e-12
    %v292 = vadd.f32 %v269, 1e-12
    %v293 = vadd.f32 %v271, 1e-12
    %v294 = vadd.f32 %v273, 1e-12
    %v295 = vadd.f32 %v275, 1e-12
    %v296 = vadd.f32 %v277, 1e-12
    %v297 = vadd.f32 %v279, 1e-12
    %v298 = vadd.f32 %v281, 1e-12
    %v299 = vadd.f32 %v283, 1e-12
    %v300 = vrsqrt.pop %v284
    %v301 = vrsqrt.pop %v285
    %v302 = vrsqrt.pop %v286
    %v303 = vrsqrt.pop %v287
    %v304 = vrsqrt.pop %v288
    %v305 = vrsqrt.pop %v289
    %v306 = vrsqrt.pop %v290
    %v307 = vrsqrt.pop %v291
    %v308 = vrsqrt.pop %v292
    %v309 = vrsqrt.pop %v293
    %v310 = vrsqrt.pop %v294
    %v311 = vrsqrt.pop %v295
    %v312 = vrsqrt.pop %v296
    %v313 = vrsqrt.pop %v297
    %v314 = vrsqrt.pop %v298
    %v315 = vrsqrt.pop %v299
    %v316 = vmul.f32 %v220, %v300
    %v317 = vmul.f32 %v221, %v301
    %v318 = vmul.f32 %v222, %v302
    %v319 = vmul.f32 %v223, %v303
    %v320 = vmul.f32 %v224, %v304
    %v321 = vmul.f32 %v225, %v305
    %v322 = vmul.f32 %v226, %v306
    %v323 = vmul.f32 %v227, %v307
    %v324 = vmul.f32 %v228, %v308
    %v325 = vmul.f32 %v229, %v309
    %v326 = vmul.f32 %v230, %v310
    %v327 = vmul.f32 %v231, %v311
    %v328 = vmul.f32 %v232, %v312
    %v329 = vmul.f32 %v233, %v313
    %v330 = vmul.f32 %v234, %v314
    %v331 = vmul.f32 %v235, %v315
    %v332 = vld [vmem:[#allocation2] sm:$0xff]
    %v333 = vld [vmem:[#allocation2 + $0x8] sm:$0xff]
    %v334 = vld [vmem:[#allocation2 + $0x10] sm:$0xff]
    %v335 = vld [vmem:[#allocation2 + $0x18] sm:$0xff]
    %v336 = vld [vmem:[#allocation2 + $0x20] sm:$0xff]
    %v337 = vld [vmem:[#allocation2 + $0x28] sm:$0xff]
    %v338 = vld [vmem:[#allocation2 + $0x30] sm:$0xff]
    %v339 = vld [vmem:[#allocation2 + $0x38] sm:$0xff]
    %v340 = vld [vmem:[#allocation2 + $0x40] sm:$0xff]
    %v341 = vld [vmem:[#allocation2 + $0x48] sm:$0xff]
    %v342 = vld [vmem:[#allocation2 + $0x50] sm:$0xff]
    %v343 = vld [vmem:[#allocation2 + $0x58] sm:$0xff]
    %v344 = vld [vmem:[#allocation2 + $0x60] sm:$0xff]
    %v345 = vld [vmem:[#allocation2 + $0x68] sm:$0xff]
    %v346 = vld [vmem:[#allocation2 + $0x70] sm:$0xff]
    %v347 = vld [vmem:[#allocation2 + $0x78] sm:$0xff]
    %348 = vmatprep.subr.mxu0 0.0
    %349 = vmatpush1.xpose.msra.mxu0 %v316
    %350 = vmatprep.subr.mxu0 0.0
    %351 = vmatpush1.xpose.msra.mxu0 %v317
    %352 = vmatprep.subr.mxu0 0.0
    %353 = vmatpush1.xpose.msra.mxu0 %v318
    %354 = vmatprep.subr.mxu0 0.0
    %355 = vmatpush1.xpose.msra.mxu0 %v319
    %356 = vmatprep.subr.mxu0 0.0
    %357 = vmatpush1.xpose.msra.mxu0 %v320
    %358 = vmatprep.subr.mxu0 0.0
    %359 = vmatpush1.xpose.msra.mxu0 %v321
    %360 = vmatprep.subr.mxu0 0.0
    %361 = vmatpush1.xpose.msra.mxu0 %v322
    %362 = vmatprep.subr.mxu0 0.0
    %363 = vmatpush1.xpose.msra.mxu0 %v323
    %364 = vmatprep.subr.mxu0 0.0
    %365 = vmatpush1.xpose.msra.mxu0 %v324
    %366 = vmatprep.subr.mxu0 0.0
    %367 = vmatpush1.xpose.msra.mxu0 %v325
    %368 = vmatprep.subr.mxu0 0.0
    %369 = vmatpush1.xpose.msra.mxu0 %v326
    %370 = vmatprep.subr.mxu0 0.0
    %371 = vmatpush1.xpose.msra.mxu0 %v327
    %372 = vmatprep.subr.mxu0 0.0
    %373 = vmatpush1.xpose.msra.mxu0 %v328
    %374 = vmatprep.subr.mxu0 0.0
    %375 = vmatpush1.xpose.msra.mxu0 %v329
    %376 = vmatprep.subr.mxu0 0.0
    %377 = vmatpush1.xpose.msra.mxu0 %v330
    %378 = vmatprep.subr.mxu0 0.0
    %379 = vmatpush1.xpose.msra.mxu0 %v331
    %380 = vmatprep.subr.mxu0 0.0
    %381 = vmatpush1.xpose.msra.mxu0 0.0
    %382 = vmatprep.subr.mxu0 0.0
    %383 = vmatpush1.xpose.msra.mxu0 0.0
    %384 = vmatprep.subr.mxu0 0.0
    %385 = vmatpush1.xpose.msra.mxu0 0.0
    %386 = vmatprep.subr.mxu0 0.0
    %387 = vmatpush1.xpose.msra.mxu0 0.0
    %388 = vmatprep.subr.mxu0 0.0
    %389 = vmatpush1.xpose.msra.mxu0 0.0
    %390 = vmatprep.subr.mxu0 0.0
    %391 = vmatpush1.xpose.msra.mxu0 0.0
    %392 = vmatprep.subr.mxu0 0.0
    %393 = vmatpush1.xpose.msra.mxu0 0.0
    %394 = vmatprep.subr.mxu0 0.0
    %395 = vmatpush1.xpose.msra.mxu0 0.0
    %396 = vmatprep.subr.mxu0 0.0
    %397 = vmatpush1.xpose.msra.mxu0 0.0
    %398 = vmatprep.subr.mxu0 0.0
    %399 = vmatpush1.xpose.msra.mxu0 0.0
    %400 = vmatprep.subr.mxu0 0.0
    %401 = vmatpush1.xpose.msra.mxu0 0.0
    %402 = vmatprep.subr.mxu0 0.0
    %403 = vmatpush1.xpose.msra.mxu0 0.0
    %404 = vmatprep.subr.mxu0 0.0
    %405 = vmatpush1.xpose.msra.mxu0 0.0
    %406 = vmatprep.subr.mxu0 0.0
    %407 = vmatpush1.xpose.msra.mxu0 0.0
    %408 = vmatprep.subr.mxu0 0.0
    %409 = vmatpush1.xpose.msra.mxu0 0.0
    %410 = vmatprep.subr.mxu0 0.0
    %411 = vmatpush1.xpose.msra.mxu0 0.0
    %412 = vmatprep.mubr.f32.mxu0 0.0
    %413 = vmatmul.mubr.f32.gmra.mrb[0].mxu0 %v332
    %v414 = vpop.f32.mrb[0].mxu0
    %v415 = vadd.f32 0.0, %v414
    %v416 = vpop.f32.mrb[0].mxu0
    %417 = vmatprep.mubr.f32.mxu0 0.0
    %418 = vmatmul.mubr.f32.gmra.mrb[0].mxu0 %v333
    %v419 = vpop.f32.mrb[0].mxu0
    %v420 = vadd.f32 0.0, %v419
    %v421 = vpop.f32.mrb[0].mxu0
    %422 = vmatprep.mubr.f32.mxu0 0.0
    %423 = vmatmul.mubr.f32.gmra.mrb[0].mxu0 %v334
    %v424 = vpop.f32.mrb[0].mxu0
    %v425 = vadd.f32 0.0, %v424
    %v426 = vpop.f32.mrb[0].mxu0
    %427 = vmatprep.mubr.f32.mxu0 0.0
    %428 = vmatmul.mubr.f32.gmra.mrb[0].mxu0 %v335
    %v429 = vpop.f32.mrb[0].mxu0
    %v430 = vadd.f32 0.0, %v429
    %v431 = vpop.f32.mrb[0].mxu0
    %432 = vmatprep.mubr.f32.mxu0 0.0
    %433 = vmatmul.mubr.f32.gmra.mrb[0].mxu0 %v336
    %v434 = vpop.f32.mrb[0].mxu0
    %v435 = vadd.f32 0.0, %v434
    %v436 = vpop.f32.mrb[0].mxu0
    %437 = vmatprep.mubr.f32.mxu0 0.0
    %438 = vmatmul.mubr.f32.gmra.mrb[0].mxu0 %v337
    %v439 = vpop.f32.mrb[0].mxu0
    %v440 = vadd.f32 0.0, %v439
    %v441 = vpop.f32.mrb[0].mxu0
    %442 = vmatprep.mubr.f32.mxu0 0.0
    %443 = vmatmul.mubr.f32.gmra.mrb[0].mxu0 %v338
    %v444 = vpop.f32.mrb[0].mxu0
    %v445 = vadd.f32 0.0, %v444
    %v446 = vpop.f32.mrb[0].mxu0
    %447 = vmatprep.mubr.f32.mxu0 0.0
    %448 = vmatmul.mubr.f32.gmra.mrb[0].mxu0 %v339
    %v449 = vpop.f32.mrb[0].mxu0
    %v450 = vadd.f32 0.0, %v449
    %v451 = vpop.f32.mrb[0].mxu0
    %452 = vmatprep.mubr.f32.mxu0 0.0
    %453 = vmatmul.mubr.f32.gmra.mrb[0].mxu0 %v340
    %v454 = vpop.f32.mrb[0].mxu0
    %v455 = vadd.f32 0.0, %v454
    %v456 = vpop.f32.mrb[0].mxu0
    %457 = vmatprep.mubr.f32.mxu0 0.0
    %458 = vmatmul.mubr.f32.gmra.mrb[0].mxu0 %v341
    %v459 = vpop.f32.mrb[0].mxu0
    %v460 = vadd.f32 0.0, %v459
    %v461 = vpop.f32.mrb[0].mxu0
    %462 = vmatprep.mubr.f32.mxu0 0.0
    %463 = vmatmul.mubr.f32.gmra.mrb[0].mxu0 %v342
    %v464 = vpop.f32.mrb[0].mxu0
    %v465 = vadd.f32 0.0, %v464
    %v466 = vpop.f32.mrb[0].mxu0
    %467 = vmatprep.mubr.f32.mxu0 0.0
    %468 = vmatmul.mubr.f32.gmra.mrb[0].mxu0 %v343
    %v469 = vpop.f32.mrb[0].mxu0
    %v470 = vadd.f32 0.0, %v469
    %v471 = vpop.f32.mrb[0].mxu0
    %472 = vmatprep.mubr.f32.mxu0 0.0
    %473 = vmatmul.mubr.f32.gmra.mrb[0].mxu0 %v344
    %v474 = vpop.f32.mrb[0].mxu0
    %v475 = vadd.f32 0.0, %v474
    %v476 = vpop.f32.mrb[0].mxu0
    %477 = vmatprep.mubr.f32.mxu0 0.0
    %478 = vmatmul.mubr.f32.gmra.mrb[0].mxu0 %v345
    %v479 = vpop.f32.mrb[0].mxu0
    %v480 = vadd.f32 0.0, %v479
    %v481 = vpop.f32.mrb[0].mxu0
    %482 = vmatprep.mubr.f32.mxu0 0.0
    %483 = vmatmul.mubr.f32.gmra.mrb[0].mxu0 %v346
    %v484 = vpop.f32.mrb[0].mxu0
    %v485 = vadd.f32 0.0, %v484
    %v486 = vpop.f32.mrb[0].mxu0
    %487 = vmatprep.mubr.f32.mxu0 0.0
    %488 = vmatmul.mubr.f32.gmra.mrb[0].mxu0 %v347
    %v489 = vpop.f32.mrb[0].mxu0
    %v490 = vadd.f32 0.0, %v489
    %v491 = vpop.f32.mrb[0].mxu0
    %492 = vdwg.mxu0
    %v493 = vmul.f32 %v415, 10.0
    %v494 = vmul.f32 %v420, 10.0
    %v495 = vmul.f32 %v425, 10.0
    %v496 = vmul.f32 %v430, 10.0
    %v497 = vmul.f32 %v435, 10.0
    %v498 = vmul.f32 %v440, 10.0
    %v499 = vmul.f32 %v445, 10.0
    %v500 = vmul.f32 %v450, 10.0
    %v501 = vmul.f32 %v455, 10.0
    %v502 = vmul.f32 %v460, 10.0
    %v503 = vmul.f32 %v465, 10.0
    %v504 = vmul.f32 %v470, 10.0
    %v505 = vmul.f32 %v475, 10.0
    %v506 = vmul.f32 %v480, 10.0
    %v507 = vmul.f32 %v485, 10.0
    %v508 = vmul.f32 %v490, 10.0
    %s509 = smul.u32 0, 128
    %v510 = vlaneseq
    %v511 = vand.u32 %v510, 127
    %v512 = vstv %s509
    %v513 = vadd.s32 %v512, %v511
    %vm514 = vcmp.lt.s32.totalorder %v513, 8
    %v515 = vsel %vm514, %v493, -1e+30
    %v516 = vsel %vm514, %v494, -1e+30
    %v517 = vsel %vm514, %v495, -1e+30
    %v518 = vsel %vm514, %v496, -1e+30
    %v519 = vsel %vm514, %v497, -1e+30
    %v520 = vsel %vm514, %v498, -1e+30
    %v521 = vsel %vm514, %v499, -1e+30
    %v522 = vsel %vm514, %v500, -1e+30
    %v523 = vsel %vm514, %v501, -1e+30
    %v524 = vsel %vm514, %v502, -1e+30
    %v525 = vsel %vm514, %v503, -1e+30
    %v526 = vsel %vm514, %v504, -1e+30
    %v527 = vsel %vm514, %v505, -1e+30
    %v528 = vsel %vm514, %v506, -1e+30
    %v529 = vsel %vm514, %v507, -1e+30
    %v530 = vsel %vm514, %v508, -1e+30
    %v531 = vld [vmem:[#allocation3] sm:$0xff]
    %v532 = vld [vmem:[#allocation3 + $0x8] sm:$0xff]
    %v533 = vld [vmem:[#allocation3 + $0x10] sm:$0xff]
    %v534 = vld [vmem:[#allocation3 + $0x18] sm:$0xff]
    %v535 = vld [vmem:[#allocation3 + $0x20] sm:$0xff]
    %v536 = vld [vmem:[#allocation3 + $0x28] sm:$0xff]
    %v537 = vld [vmem:[#allocation3 + $0x30] sm:$0xff]
    %v538 = vld [vmem:[#allocation3 + $0x38] sm:$0xff]
    %v539 = vld [vmem:[#allocation3 + $0x40] sm:$0xff]
    %v540 = vld [vmem:[#allocation3 + $0x48] sm:$0xff]
    %v541 = vld [vmem:[#allocation3 + $0x50] sm:$0xff]
    %v542 = vld [vmem:[#allocation3 + $0x58] sm:$0xff]
    %v543 = vld [vmem:[#allocation3 + $0x60] sm:$0xff]
    %v544 = vld [vmem:[#allocation3 + $0x68] sm:$0xff]
    %v545 = vld [vmem:[#allocation3 + $0x70] sm:$0xff]
    %v546 = vld [vmem:[#allocation3 + $0x78] sm:$0xff]
    %547 = vmax.xlane.f32.xlu0 %v515
    %v548 = vpop.xlane.xlu0 %547
    %549 = vmax.xlane.f32.xlu0 %v516
    %v550 = vpop.xlane.xlu0 %549
    %551 = vmax.xlane.f32.xlu0 %v517
    %v552 = vpop.xlane.xlu0 %551
    %553 = vmax.xlane.f32.xlu0 %v518
    %v554 = vpop.xlane.xlu0 %553
    %555 = vmax.xlane.f32.xlu0 %v519
    %v556 = vpop.xlane.xlu0 %555
    %557 = vmax.xlane.f32.xlu0 %v520
    %v558 = vpop.xlane.xlu0 %557
    %559 = vmax.xlane.f32.xlu0 %v521
    %v560 = vpop.xlane.xlu0 %559
    %561 = vmax.xlane.f32.xlu0 %v522
    %v562 = vpop.xlane.xlu0 %561
    %563 = vmax.xlane.f32.xlu0 %v523
    %v564 = vpop.xlane.xlu0 %563
    %565 = vmax.xlane.f32.xlu0 %v524
    %v566 = vpop.xlane.xlu0 %565
    %567 = vmax.xlane.f32.xlu0 %v525
    %v568 = vpop.xlane.xlu0 %567
    %569 = vmax.xlane.f32.xlu0 %v526
    %v570 = vpop.xlane.xlu0 %569
    %571 = vmax.xlane.f32.xlu0 %v527
    %v572 = vpop.xlane.xlu0 %571
    %573 = vmax.xlane.f32.xlu0 %v528
    %v574 = vpop.xlane.xlu0 %573
    %575 = vmax.xlane.f32.xlu0 %v529
    %v576 = vpop.xlane.xlu0 %575
    %577 = vmax.xlane.f32.xlu0 %v530
    %v578 = vpop.xlane.xlu0 %577
    %v579 = vmax.f32 %v531, %v548
    %v580 = vmax.f32 %v532, %v550
    %v581 = vmax.f32 %v533, %v552
    %v582 = vmax.f32 %v534, %v554
    %v583 = vmax.f32 %v535, %v556
    %v584 = vmax.f32 %v536, %v558
    %v585 = vmax.f32 %v537, %v560
    %v586 = vmax.f32 %v538, %v562
    %v587 = vmax.f32 %v539, %v564
    %v588 = vmax.f32 %v540, %v566
    %v589 = vmax.f32 %v541, %v568
    %v590 = vmax.f32 %v542, %v570
    %v591 = vmax.f32 %v543, %v572
    %v592 = vmax.f32 %v544, %v574
    %v593 = vmax.f32 %v545, %v576
    %v594 = vmax.f32 %v546, %v578
    %596 = vset.pattern.permute.xlu0 0
    %597 = vperm.xlu0 %596, %v579
    %v598 = vpop.permute.xlu0 %597
    %601 = vset.pattern.permute.xlu0 0
    %602 = vperm.xlu0 %601, %v580
    %v603 = vpop.permute.xlu0 %602
    %606 = vset.pattern.permute.xlu0 0
    %607 = vperm.xlu0 %606, %v581
    %v608 = vpop.permute.xlu0 %607
    %611 = vset.pattern.permute.xlu0 0
    %612 = vperm.xlu0 %611, %v582
    %v613 = vpop.permute.xlu0 %612
    %616 = vset.pattern.permute.xlu0 0
    %617 = vperm.xlu0 %616, %v583
    %v618 = vpop.permute.xlu0 %617
    %621 = vset.pattern.permute.xlu0 0
    %622 = vperm.xlu0 %621, %v584
    %v623 = vpop.permute.xlu0 %622
    %626 = vset.pattern.permute.xlu0 0
    %627 = vperm.xlu0 %626, %v585
    %v628 = vpop.permute.xlu0 %627
    %631 = vset.pattern.permute.xlu0 0
    %632 = vperm.xlu0 %631, %v586
    %v633 = vpop.permute.xlu0 %632
    %636 = vset.pattern.permute.xlu0 0
    %637 = vperm.xlu0 %636, %v587
    %v638 = vpop.permute.xlu0 %637
    %641 = vset.pattern.permute.xlu0 0
    %642 = vperm.xlu0 %641, %v588
    %v643 = vpop.permute.xlu0 %642
    %646 = vset.pattern.permute.xlu0 0
    %647 = vperm.xlu0 %646, %v589
    %v648 = vpop.permute.xlu0 %647
    %651 = vset.pattern.permute.xlu0 0
    %652 = vperm.xlu0 %651, %v590
    %v653 = vpop.permute.xlu0 %652
    %656 = vset.pattern.permute.xlu0 0
    %657 = vperm.xlu0 %656, %v591
    %v658 = vpop.permute.xlu0 %657
    %661 = vset.pattern.permute.xlu0 0
    %662 = vperm.xlu0 %661, %v592
    %v663 = vpop.permute.xlu0 %662
    %666 = vset.pattern.permute.xlu0 0
    %667 = vperm.xlu0 %666, %v593
    %v668 = vpop.permute.xlu0 %667
    %671 = vset.pattern.permute.xlu0 0
    %672 = vperm.xlu0 %671, %v594
    %v673 = vpop.permute.xlu0 %672
    %v675 = vsub.f32 %v515, %v598
    %v676 = vsub.f32 %v516, %v603
    %v677 = vsub.f32 %v517, %v608
    %v678 = vsub.f32 %v518, %v613
    %v679 = vsub.f32 %v519, %v618
    %v680 = vsub.f32 %v520, %v623
    %v681 = vsub.f32 %v521, %v628
    %v682 = vsub.f32 %v522, %v633
    %v683 = vsub.f32 %v523, %v638
    %v684 = vsub.f32 %v524, %v643
    %v685 = vsub.f32 %v525, %v648
    %v686 = vsub.f32 %v526, %v653
    %v687 = vsub.f32 %v527, %v658
    %v688 = vsub.f32 %v528, %v663
    %v689 = vsub.f32 %v529, %v668
    %v690 = vsub.f32 %v530, %v673
    %v691 = vmul.f32 %v675, 1.442695
    %v692 = vpow.pop %v691
    %v693 = vmul.f32 %v676, 1.442695
    %v694 = vpow.pop %v693
    %v695 = vmul.f32 %v677, 1.442695
    %v696 = vpow.pop %v695
    %v697 = vmul.f32 %v678, 1.442695
    %v698 = vpow.pop %v697
    %v699 = vmul.f32 %v679, 1.442695
    %v700 = vpow.pop %v699
    %v701 = vmul.f32 %v680, 1.442695
    %v702 = vpow.pop %v701
    %v703 = vmul.f32 %v681, 1.442695
    %v704 = vpow.pop %v703
    %v705 = vmul.f32 %v682, 1.442695
    %v706 = vpow.pop %v705
    %v707 = vmul.f32 %v683, 1.442695
    %v708 = vpow.pop %v707
    %v709 = vmul.f32 %v684, 1.442695
    %v710 = vpow.pop %v709
    %v711 = vmul.f32 %v685, 1.442695
    %v712 = vpow.pop %v711
    %v713 = vmul.f32 %v686, 1.442695
    %v714 = vpow.pop %v713
    %v715 = vmul.f32 %v687, 1.442695
    %v716 = vpow.pop %v715
    %v717 = vmul.f32 %v688, 1.442695
    %v718 = vpow.pop %v717
    %v719 = vmul.f32 %v689, 1.442695
    %v720 = vpow.pop %v719
    %v721 = vmul.f32 %v690, 1.442695
    %v722 = vpow.pop %v721
    %v723 = vsub.f32 %v531, %v579
    %v724 = vsub.f32 %v532, %v580
    %v725 = vsub.f32 %v533, %v581
    %v726 = vsub.f32 %v534, %v582
    %v727 = vsub.f32 %v535, %v583
    %v728 = vsub.f32 %v536, %v584
    %v729 = vsub.f32 %v537, %v585
    %v730 = vsub.f32 %v538, %v586
    %v731 = vsub.f32 %v539, %v587
    %v732 = vsub.f32 %v540, %v588
    %v733 = vsub.f32 %v541, %v589
    %v734 = vsub.f32 %v542, %v590
    %v735 = vsub.f32 %v543, %v591
    %v736 = vsub.f32 %v544, %v592
    %v737 = vsub.f32 %v545, %v593
    %v738 = vsub.f32 %v546, %v594
    %v739 = vmul.f32 %v723, 1.442695
    %v740 = vpow.pop %v739
    %v741 = vmul.f32 %v724, 1.442695
    %v742 = vpow.pop %v741
    %v743 = vmul.f32 %v725, 1.442695
    %v744 = vpow.pop %v743
    %v745 = vmul.f32 %v726, 1.442695
    %v746 = vpow.pop %v745
    %v747 = vmul.f32 %v727, 1.442695
    %v748 = vpow.pop %v747
    %v749 = vmul.f32 %v728, 1.442695
    %v750 = vpow.pop %v749
    %v751 = vmul.f32 %v729, 1.442695
    %v752 = vpow.pop %v751
    %v753 = vmul.f32 %v730, 1.442695
    %v754 = vpow.pop %v753
    %v755 = vmul.f32 %v731, 1.442695
    %v756 = vpow.pop %v755
    %v757 = vmul.f32 %v732, 1.442695
    %v758 = vpow.pop %v757
    %v759 = vmul.f32 %v733, 1.442695
    %v760 = vpow.pop %v759
    %v761 = vmul.f32 %v734, 1.442695
    %v762 = vpow.pop %v761
    %v763 = vmul.f32 %v735, 1.442695
    %v764 = vpow.pop %v763
    %v765 = vmul.f32 %v736, 1.442695
    %v766 = vpow.pop %v765
    %v767 = vmul.f32 %v737, 1.442695
    %v768 = vpow.pop %v767
    %v769 = vmul.f32 %v738, 1.442695
    %v770 = vpow.pop %v769
    %v771 = vld [vmem:[#allocation4] sm:$0xff]
    %v772 = vld [vmem:[#allocation4 + $0x8] sm:$0xff]
    %v773 = vld [vmem:[#allocation4 + $0x10] sm:$0xff]
    %v774 = vld [vmem:[#allocation4 + $0x18] sm:$0xff]
    %v775 = vld [vmem:[#allocation4 + $0x20] sm:$0xff]
    %v776 = vld [vmem:[#allocation4 + $0x28] sm:$0xff]
    %v777 = vld [vmem:[#allocation4 + $0x30] sm:$0xff]
    %v778 = vld [vmem:[#allocation4 + $0x38] sm:$0xff]
    %v779 = vld [vmem:[#allocation4 + $0x40] sm:$0xff]
    %v780 = vld [vmem:[#allocation4 + $0x48] sm:$0xff]
    %v781 = vld [vmem:[#allocation4 + $0x50] sm:$0xff]
    %v782 = vld [vmem:[#allocation4 + $0x58] sm:$0xff]
    %v783 = vld [vmem:[#allocation4 + $0x60] sm:$0xff]
    %v784 = vld [vmem:[#allocation4 + $0x68] sm:$0xff]
    %v785 = vld [vmem:[#allocation4 + $0x70] sm:$0xff]
    %v786 = vld [vmem:[#allocation4 + $0x78] sm:$0xff]
    %v787 = vmul.f32 %v740, %v771
    %v788 = vmul.f32 %v742, %v772
    %v789 = vmul.f32 %v744, %v773
    %v790 = vmul.f32 %v746, %v774
    %v791 = vmul.f32 %v748, %v775
    %v792 = vmul.f32 %v750, %v776
    %v793 = vmul.f32 %v752, %v777
    %v794 = vmul.f32 %v754, %v778
    %v795 = vmul.f32 %v756, %v779
    %v796 = vmul.f32 %v758, %v780
    %v797 = vmul.f32 %v760, %v781
    %v798 = vmul.f32 %v762, %v782
    %v799 = vmul.f32 %v764, %v783
    %v800 = vmul.f32 %v766, %v784
    %v801 = vmul.f32 %v768, %v785
    %v802 = vmul.f32 %v770, %v786
    %803 = vadd.xlane.f32.xlu0 %v692
    %v804 = vpop.xlane.xlu0 %803
    %805 = vadd.xlane.f32.xlu0 %v694
    %v806 = vpop.xlane.xlu0 %805
    %807 = vadd.xlane.f32.xlu0 %v696
    %v808 = vpop.xlane.xlu0 %807
    %809 = vadd.xlane.f32.xlu0 %v698
    %v810 = vpop.xlane.xlu0 %809
    %811 = vadd.xlane.f32.xlu0 %v700
    %v812 = vpop.xlane.xlu0 %811
    %813 = vadd.xlane.f32.xlu0 %v702
    %v814 = vpop.xlane.xlu0 %813
    %815 = vadd.xlane.f32.xlu0 %v704
    %v816 = vpop.xlane.xlu0 %815
    %817 = vadd.xlane.f32.xlu0 %v706
    %v818 = vpop.xlane.xlu0 %817
    %819 = vadd.xlane.f32.xlu0 %v708
    %v820 = vpop.xlane.xlu0 %819
    %821 = vadd.xlane.f32.xlu0 %v710
    %v822 = vpop.xlane.xlu0 %821
    %823 = vadd.xlane.f32.xlu0 %v712
    %v824 = vpop.xlane.xlu0 %823
    %825 = vadd.xlane.f32.xlu0 %v714
    %v826 = vpop.xlane.xlu0 %825
    %827 = vadd.xlane.f32.xlu0 %v716
    %v828 = vpop.xlane.xlu0 %827
    %829 = vadd.xlane.f32.xlu0 %v718
    %v830 = vpop.xlane.xlu0 %829
    %831 = vadd.xlane.f32.xlu0 %v720
    %v832 = vpop.xlane.xlu0 %831
    %833 = vadd.xlane.f32.xlu0 %v722
    %v834 = vpop.xlane.xlu0 %833
    %v835 = vadd.f32 %v787, %v804
    %v836 = vadd.f32 %v788, %v806
    %v837 = vadd.f32 %v789, %v808
    %v838 = vadd.f32 %v790, %v810
    %v839 = vadd.f32 %v791, %v812
    %v840 = vadd.f32 %v792, %v814
    %v841 = vadd.f32 %v793, %v816
    %v842 = vadd.f32 %v794, %v818
    %v843 = vadd.f32 %v795, %v820
    %v844 = vadd.f32 %v796, %v822
    %v845 = vadd.f32 %v797, %v824
    %v846 = vadd.f32 %v798, %v826
    %v847 = vadd.f32 %v799, %v828
    %v848 = vadd.f32 %v800, %v830
    %v849 = vadd.f32 %v801, %v832
    %v850 = vadd.f32 %v802, %v834
    %vm851 = vcmask 7168
    %852 = vst.msk [vmem:[#allocation4] sm:$0xff] %vm851, %v835
    %853 = vst.msk [vmem:[#allocation4 + $0x8] sm:$0xff] %vm851, %v836
    %854 = vst.msk [vmem:[#allocation4 + $0x10] sm:$0xff] %vm851, %v837
    %855 = vst.msk [vmem:[#allocation4 + $0x18] sm:$0xff] %vm851, %v838
    %856 = vst.msk [vmem:[#allocation4 + $0x20] sm:$0xff] %vm851, %v839
    %857 = vst.msk [vmem:[#allocation4 + $0x28] sm:$0xff] %vm851, %v840
    %858 = vst.msk [vmem:[#allocation4 + $0x30] sm:$0xff] %vm851, %v841
    %859 = vst.msk [vmem:[#allocation4 + $0x38] sm:$0xff] %vm851, %v842
    %860 = vst.msk [vmem:[#allocation4 + $0x40] sm:$0xff] %vm851, %v843
    %861 = vst.msk [vmem:[#allocation4 + $0x48] sm:$0xff] %vm851, %v844
    %862 = vst.msk [vmem:[#allocation4 + $0x50] sm:$0xff] %vm851, %v845
    %863 = vst.msk [vmem:[#allocation4 + $0x58] sm:$0xff] %vm851, %v846
    %864 = vst.msk [vmem:[#allocation4 + $0x60] sm:$0xff] %vm851, %v847
    %865 = vst.msk [vmem:[#allocation4 + $0x68] sm:$0xff] %vm851, %v848
    %866 = vst.msk [vmem:[#allocation4 + $0x70] sm:$0xff] %vm851, %v849
    %867 = vst.msk [vmem:[#allocation4 + $0x78] sm:$0xff] %vm851, %v850
    %868 = vst.msk [vmem:[#allocation3] sm:$0xff] %vm851, %v579
    %869 = vst.msk [vmem:[#allocation3 + $0x8] sm:$0xff] %vm851, %v580
    %870 = vst.msk [vmem:[#allocation3 + $0x10] sm:$0xff] %vm851, %v581
    %871 = vst.msk [vmem:[#allocation3 + $0x18] sm:$0xff] %vm851, %v582
    %872 = vst.msk [vmem:[#allocation3 + $0x20] sm:$0xff] %vm851, %v583
    %873 = vst.msk [vmem:[#allocation3 + $0x28] sm:$0xff] %vm851, %v584
    %874 = vst.msk [vmem:[#allocation3 + $0x30] sm:$0xff] %vm851, %v585
    %875 = vst.msk [vmem:[#allocation3 + $0x38] sm:$0xff] %vm851, %v586
    %876 = vst.msk [vmem:[#allocation3 + $0x40] sm:$0xff] %vm851, %v587
    %877 = vst.msk [vmem:[#allocation3 + $0x48] sm:$0xff] %vm851, %v588
    %878 = vst.msk [vmem:[#allocation3 + $0x50] sm:$0xff] %vm851, %v589
    %879 = vst.msk [vmem:[#allocation3 + $0x58] sm:$0xff] %vm851, %v590
    %880 = vst.msk [vmem:[#allocation3 + $0x60] sm:$0xff] %vm851, %v591
    %881 = vst.msk [vmem:[#allocation3 + $0x68] sm:$0xff] %vm851, %v592
    %882 = vst.msk [vmem:[#allocation3 + $0x70] sm:$0xff] %vm851, %v593
    %883 = vst.msk [vmem:[#allocation3 + $0x78] sm:$0xff] %vm851, %v594
    %p884 = scmp.eq.s32.totalorder 0, 0
    // Predicated region
    $region22: #{tpu_custom_call.1} parent=1 // pred_check
      %p885 = pneg %p884
    $region23: #{tpu_custom_call.1} parent=1 // pred_check_branch
      %887 = sbr.rel (%p885) target = $region25
    $region24: #{tpu_custom_call.1} parent=1 // pred_region
      %s888 = smul.u32 0, 128
      %v889 = vlaneseq
      %v890 = vshrl.u32 %v889, 7
      %v891 = vadd.s32 %v890, 8
      %v892 = vadd.s32 %v890, 16
      %v893 = vadd.s32 %v890, 24
      %v894 = vadd.s32 %v890, 32
      %v895 = vadd.s32 %v890, 40
      %v896 = vadd.s32 %v890, 48
      %v897 = vadd.s32 %v890, 56
      %v898 = vadd.s32 %v890, 64
      %v899 = vadd.s32 %v890, 72
      %v900 = vadd.s32 %v890, 80
      %v901 = vadd.s32 %v890, 88
      %v902 = vadd.s32 %v890, 96
      %v903 = vadd.s32 %v890, 104
      %v904 = vadd.s32 %v890, 112
      %v905 = vadd.s32 %v890, 120
      %v906 = vstv %s888
      %v907 = vadd.s32 %v906, %v890
      %v908 = vadd.s32 %v906, %v891
      %v909 = vadd.s32 %v906, %v892
      %v910 = vadd.s32 %v906, %v893
      %v911 = vadd.s32 %v906, %v894
      %v912 = vadd.s32 %v906, %v895
      %v913 = vadd.s32 %v906, %v896
      %v914 = vadd.s32 %v906, %v897
      %v915 = vadd.s32 %v906, %v898
      %v916 = vadd.s32 %v906, %v899
      %v917 = vadd.s32 %v906, %v900
      %v918 = vadd.s32 %v906, %v901
      %v919 = vadd.s32 %v906, %v902
      %v920 = vadd.s32 %v906, %v903
      %v921 = vadd.s32 %v906, %v904
      %v922 = vadd.s32 %v906, %v905
      %v923 = vld [vmem:[#allocation5] sm:$0xff]
      %v924 = vld [vmem:[#allocation5 + $0x8] sm:$0xff]
      %v925 = vld [vmem:[#allocation5 + $0x10] sm:$0xff]
      %v926 = vld [vmem:[#allocation5 + $0x18] sm:$0xff]
      %v927 = vld [vmem:[#allocation5 + $0x20] sm:$0xff]
      %v928 = vld [vmem:[#allocation5 + $0x28] sm:$0xff]
      %v929 = vld [vmem:[#allocation5 + $0x30] sm:$0xff]
      %v930 = vld [vmem:[#allocation5 + $0x38] sm:$0xff]
      %v931 = vld [vmem:[#allocation5 + $0x40] sm:$0xff]
      %v932 = vld [vmem:[#allocation5 + $0x48] sm:$0xff]
      %v933 = vld [vmem:[#allocation5 + $0x50] sm:$0xff]
      %v934 = vld [vmem:[#allocation5 + $0x58] sm:$0xff]
      %v935 = vld [vmem:[#allocation5 + $0x60] sm:$0xff]
      %v936 = vld [vmem:[#allocation5 + $0x68] sm:$0xff]
      %v937 = vld [vmem:[#allocation5 + $0x70] sm:$0xff]
      %v938 = vld [vmem:[#allocation5 + $0x78] sm:$0xff]
      %vm939 = vcmp.eq.s32.totalorder %v907, %v513
      %vm940 = vcmp.eq.s32.totalorder %v908, %v513
      %vm941 = vcmp.eq.s32.totalorder %v909, %v513
      %vm942 = vcmp.eq.s32.totalorder %v910, %v513
      %vm943 = vcmp.eq.s32.totalorder %v911, %v513
      %vm944 = vcmp.eq.s32.totalorder %v912, %v513
      %vm945 = vcmp.eq.s32.totalorder %v913, %v513
      %vm946 = vcmp.eq.s32.totalorder %v914, %v513
      %vm947 = vcmp.eq.s32.totalorder %v915, %v513
      %vm948 = vcmp.eq.s32.totalorder %v916, %v513
      %vm949 = vcmp.eq.s32.totalorder %v917, %v513
      %vm950 = vcmp.eq.s32.totalorder %v918, %v513
      %vm951 = vcmp.eq.s32.totalorder %v919, %v513
      %vm952 = vcmp.eq.s32.totalorder %v920, %v513
      %vm953 = vcmp.eq.s32.totalorder %v921, %v513
      %vm954 = vcmp.eq.s32.totalorder %v922, %v513
      %v955 = vsel %vm939, %v515, 0.0
      %v956 = vsel %vm940, %v516, 0.0
      %v957 = vsel %vm941, %v517, 0.0
      %v958 = vsel %vm942, %v518, 0.0
      %v959 = vsel %vm943, %v519, 0.0
      %v960 = vsel %vm944, %v520, 0.0
      %v961 = vsel %vm945, %v521, 0.0
      %v962 = vsel %vm946, %v522, 0.0
      %v963 = vsel %vm947, %v523, 0.0
      %v964 = vsel %vm948, %v524, 0.0
      %v965 = vsel %vm949, %v525, 0.0
      %v966 = vsel %vm950, %v526, 0.0
      %v967 = vsel %vm951, %v527, 0.0
      %v968 = vsel %vm952, %v528, 0.0
      %v969 = vsel %vm953, %v529, 0.0
      %v970 = vsel %vm954, %v530, 0.0
      %971 = vadd.xlane.f32.xlu0 %v955
      %v972 = vpop.xlane.xlu0 %971
      %973 = vadd.xlane.f32.xlu0 %v956
      %v974 = vpop.xlane.xlu0 %973
      %975 = vadd.xlane.f32.xlu0 %v957
      %v976 = vpop.xlane.xlu0 %975
      %977 = vadd.xlane.f32.xlu0 %v958
      %v978 = vpop.xlane.xlu0 %977
      %979 = vadd.xlane.f32.xlu0 %v959
      %v980 = vpop.xlane.xlu0 %979
      %981 = vadd.xlane.f32.xlu0 %v960
      %v982 = vpop.xlane.xlu0 %981
      %983 = vadd.xlane.f32.xlu0 %v961
      %v984 = vpop.xlane.xlu0 %983
      %985 = vadd.xlane.f32.xlu0 %v962
      %v986 = vpop.xlane.xlu0 %985
      %987 = vadd.xlane.f32.xlu0 %v963
      %v988 = vpop.xlane.xlu0 %987
      %989 = vadd.xlane.f32.xlu0 %v964
      %v990 = vpop.xlane.xlu0 %989
      %991 = vadd.xlane.f32.xlu0 %v965
      %v992 = vpop.xlane.xlu0 %991
      %993 = vadd.xlane.f32.xlu0 %v966
      %v994 = vpop.xlane.xlu0 %993
      %995 = vadd.xlane.f32.xlu0 %v967
      %v996 = vpop.xlane.xlu0 %995
      %997 = vadd.xlane.f32.xlu0 %v968
      %v998 = vpop.xlane.xlu0 %997
      %999 = vadd.xlane.f32.xlu0 %v969
      %v1000 = vpop.xlane.xlu0 %999
      %1001 = vadd.xlane.f32.xlu0 %v970
      %v1002 = vpop.xlane.xlu0 %1001
      %v1003 = vadd.f32 %v923, %v972
      %v1004 = vadd.f32 %v924, %v974
      %v1005 = vadd.f32 %v925, %v976
      %v1006 = vadd.f32 %v926, %v978
      %v1007 = vadd.f32 %v927, %v980
      %v1008 = vadd.f32 %v928, %v982
      %v1009 = vadd.f32 %v929, %v984
      %v1010 = vadd.f32 %v930, %v986
      %v1011 = vadd.f32 %v931, %v988
      %v1012 = vadd.f32 %v932, %v990
      %v1013 = vadd.f32 %v933, %v992
      %v1014 = vadd.f32 %v934, %v994
      %v1015 = vadd.f32 %v935, %v996
      %v1016 = vadd.f32 %v936, %v998
      %v1017 = vadd.f32 %v937, %v1000
      %v1018 = vadd.f32 %v938, %v1002
      %1019 = vst.msk [vmem:[#allocation5] sm:$0xff] %vm851, %v1003
      %1020 = vst.msk [vmem:[#allocation5 + $0x8] sm:$0xff] %vm851, %v1004
      %1021 = vst.msk [vmem:[#allocation5 + $0x10] sm:$0xff] %vm851, %v1005
      %1022 = vst.msk [vmem:[#allocation5 + $0x18] sm:$0xff] %vm851, %v1006
      %1023 = vst.msk [vmem:[#allocation5 + $0x20] sm:$0xff] %vm851, %v1007
      %1024 = vst.msk [vmem:[#allocation5 + $0x28] sm:$0xff] %vm851, %v1008
      %1025 = vst.msk [vmem:[#allocation5 + $0x30] sm:$0xff] %vm851, %v1009
      %1026 = vst.msk [vmem:[#allocation5 + $0x38] sm:$0xff] %vm851, %v1010
      %1027 = vst.msk [vmem:[#allocation5 + $0x40] sm:$0xff] %vm851, %v1011
      %1028 = vst.msk [vmem:[#allocation5 + $0x48] sm:$0xff] %vm851, %v1012
      %1029 = vst.msk [vmem:[#allocation5 + $0x50] sm:$0xff] %vm851, %v1013
      %1030 = vst.msk [vmem:[#allocation5 + $0x58] sm:$0xff] %vm851, %v1014
      %1031 = vst.msk [vmem:[#allocation5 + $0x60] sm:$0xff] %vm851, %v1015
      %1032 = vst.msk [vmem:[#allocation5 + $0x68] sm:$0xff] %vm851, %v1016
      %1033 = vst.msk [vmem:[#allocation5 + $0x70] sm:$0xff] %vm851, %v1017
      %1034 = vst.msk [vmem:[#allocation5 + $0x78] sm:$0xff] %vm851, %v1018
    $region25: #{tpu_custom_call.1} parent=1 // pred_fallthru
      _
    // Predicated region
    $region26: #{tpu_custom_call.1} parent=1 // pred_check
      %p1035 = pneg %p39
    $region27: #{tpu_custom_call.1} parent=1 // pred_check_branch
      %1037 = sbr.rel (%p1035) target = $region29
    $region28: #{tpu_custom_call.1} parent=1 // pred_region
      %v1038 = vld [vmem:[#allocation3] sm:$0xff]
      %v1039 = vld [vmem:[#allocation3 + $0x8] sm:$0xff]
      %v1040 = vld [vmem:[#allocation3 + $0x10] sm:$0xff]
      %v1041 = vld [vmem:[#allocation3 + $0x18] sm:$0xff]
      %v1042 = vld [vmem:[#allocation3 + $0x20] sm:$0xff]
      %v1043 = vld [vmem:[#allocation3 + $0x28] sm:$0xff]
      %v1044 = vld [vmem:[#allocation3 + $0x30] sm:$0xff]
      %v1045 = vld [vmem:[#allocation3 + $0x38] sm:$0xff]
      %v1046 = vld [vmem:[#allocation3 + $0x40] sm:$0xff]
      %v1047 = vld [vmem:[#allocation3 + $0x48] sm:$0xff]
      %v1048 = vld [vmem:[#allocation3 + $0x50] sm:$0xff]
      %v1049 = vld [vmem:[#allocation3 + $0x58] sm:$0xff]
      %v1050 = vld [vmem:[#allocation3 + $0x60] sm:$0xff]
      %v1051 = vld [vmem:[#allocation3 + $0x68] sm:$0xff]
      %v1052 = vld [vmem:[#allocation3 + $0x70] sm:$0xff]
      %v1053 = vld [vmem:[#allocation3 + $0x78] sm:$0xff]
      %v1054 = vld [vmem:[#allocation4] sm:$0xff]
      %v1055 = vld [vmem:[#allocation4 + $0x8] sm:$0xff]
      %v1056 = vld [vmem:[#allocation4 + $0x10] sm:$0xff]
      %v1057 = vld [vmem:[#allocation4 + $0x18] sm:$0xff]
      %v1058 = vld [vmem:[#allocation4 + $0x20] sm:$0xff]
      %v1059 = vld [vmem:[#allocation4 + $0x28] sm:$0xff]
      %v1060 = vld [vmem:[#allocation4 + $0x30] sm:$0xff]
      %v1061 = vld [vmem:[#allocation4 + $0x38] sm:$0xff]
      %v1062 = vld [vmem:[#allocation4 + $0x40] sm:$0xff]
      %v1063 = vld [vmem:[#allocation4 + $0x48] sm:$0xff]
      %v1064 = vld [vmem:[#allocation4 + $0x50] sm:$0xff]
      %v1065 = vld [vmem:[#allocation4 + $0x58] sm:$0xff]
      %v1066 = vld [vmem:[#allocation4 + $0x60] sm:$0xff]
      %v1067 = vld [vmem:[#allocation4 + $0x68] sm:$0xff]
      %v1068 = vld [vmem:[#allocation4 + $0x70] sm:$0xff]
      %v1069 = vld [vmem:[#allocation4 + $0x78] sm:$0xff]
      %v1070 = vlog2.pop %v1054
      %v1071 = vmul.f32 %v1070, 0.6931472
      %v1072 = vlog2.pop %v1055
      %v1073 = vmul.f32 %v1072, 0.6931472
      %v1074 = vlog2.pop %v1056
      %v1075 = vmul.f32 %v1074, 0.6931472
      %v1076 = vlog2.pop %v1057
      %v1077 = vmul.f32 %v1076, 0.6931472
      %v1078 = vlog2.pop %v1058
      %v1079 = vmul.f32 %v1078, 0.6931472
      %v1080 = vlog2.pop %v1059
      %v1081 = vmul.f32 %v1080, 0.6931472
      %v1082 = vlog2.pop %v1060
      %v1083 = vmul.f32 %v1082, 0.6931472
      %v1084 = vlog2.pop %v1061
      %v1085 = vmul.f32 %v1084, 0.6931472
      %v1086 = vlog2.pop %v1062
      %v1087 = vmul.f32 %v1086, 0.6931472
      %v1088 = vlog2.pop %v1063
      %v1089 = vmul.f32 %v1088, 0.6931472
      %v1090 = vlog2.pop %v1064
      %v1091 = vmul.f32 %v1090, 0.6931472
      %v1092 = vlog2.pop %v1065
      %v1093 = vmul.f32 %v1092, 0.6931472
      %v1094 = vlog2.pop %v1066
      %v1095 = vmul.f32 %v1094, 0.6931472
      %v1096 = vlog2.pop %v1067
      %v1097 = vmul.f32 %v1096, 0.6931472
      %v1098 = vlog2.pop %v1068
      %v1099 = vmul.f32 %v1098, 0.6931472
      %v1100 = vlog2.pop %v1069
      %v1101 = vmul.f32 %v1100, 0.6931472
      %v1102 = vadd.f32 %v1038, %v1071
      %v1103 = vadd.f32 %v1039, %v1073
      %v1104 = vadd.f32 %v1040, %v1075
      %v1105 = vadd.f32 %v1041, %v1077
      %v1106 = vadd.f32 %v1042, %v1079
      %v1107 = vadd.f32 %v1043, %v1081
      %v1108 = vadd.f32 %v1044, %v1083
      %v1109 = vadd.f32 %v1045, %v1085
      %v1110 = vadd.f32 %v1046, %v1087
      %v1111 = vadd.f32 %v1047, %v1089
      %v1112 = vadd.f32 %v1048, %v1091
      %v1113 = vadd.f32 %v1049, %v1093
      %v1114 = vadd.f32 %v1050, %v1095
      %v1115 = vadd.f32 %v1051, %v1097
      %v1116 = vadd.f32 %v1052, %v1099
      %v1117 = vadd.f32 %v1053, %v1101
      %v1118 = vld [vmem:[#allocation5] sm:$0xff]
      %v1119 = vld [vmem:[#allocation5 + $0x8] sm:$0xff]
      %v1120 = vld [vmem:[#allocation5 + $0x10] sm:$0xff]
      %v1121 = vld [vmem:[#allocation5 + $0x18] sm:$0xff]
      %v1122 = vld [vmem:[#allocation5 + $0x20] sm:$0xff]
      %v1123 = vld [vmem:[#allocation5 + $0x28] sm:$0xff]
      %v1124 = vld [vmem:[#allocation5 + $0x30] sm:$0xff]
      %v1125 = vld [vmem:[#allocation5 + $0x38] sm:$0xff]
      %v1126 = vld [vmem:[#allocation5 + $0x40] sm:$0xff]
      %v1127 = vld [vmem:[#allocation5 + $0x48] sm:$0xff]
      %v1128 = vld [vmem:[#allocation5 + $0x50] sm:$0xff]
      %v1129 = vld [vmem:[#allocation5 + $0x58] sm:$0xff]
      %v1130 = vld [vmem:[#allocation5 + $0x60] sm:$0xff]
      %v1131 = vld [vmem:[#allocation5 + $0x68] sm:$0xff]
      %v1132 = vld [vmem:[#allocation5 + $0x70] sm:$0xff]
      %v1133 = vld [vmem:[#allocation5 + $0x78] sm:$0xff]
      %v1134 = vsub.f32 %v1102, %v1118
      %v1135 = vsub.f32 %v1103, %v1119
      %v1136 = vsub.f32 %v1104, %v1120
      %v1137 = vsub.f32 %v1105, %v1121
      %v1138 = vsub.f32 %v1106, %v1122
      %v1139 = vsub.f32 %v1107, %v1123
      %v1140 = vsub.f32 %v1108, %v1124
      %v1141 = vsub.f32 %v1109, %v1125
      %v1142 = vsub.f32 %v1110, %v1126
      %v1143 = vsub.f32 %v1111, %v1127
      %v1144 = vsub.f32 %v1112, %v1128
      %v1145 = vsub.f32 %v1113, %v1129
      %v1146 = vsub.f32 %v1114, %v1130
      %v1147 = vsub.f32 %v1115, %v1131
      %v1148 = vsub.f32 %v1116, %v1132
      %v1149 = vsub.f32 %v1117, %v1133
      %1150 = vst.msk [vmem:[%s2] sm:$0xff] %vm851, %v1134
      %1151 = vst.msk [vmem:[%s2 + $0x8] sm:$0xff] %vm851, %v1135
      %1152 = vst.msk [vmem:[%s2 + $0x10] sm:$0xff] %vm851, %v1136
      %1153 = vst.msk [vmem:[%s2 + $0x18] sm:$0xff] %vm851, %v1137
      %1154 = vst.msk [vmem:[%s2 + $0x20] sm:$0xff] %vm851, %v1138
      %1155 = vst.msk [vmem:[%s2 + $0x28] sm:$0xff] %vm851, %v1139
      %1156 = vst.msk [vmem:[%s2 + $0x30] sm:$0xff] %vm851, %v1140
      %1157 = vst.msk [vmem:[%s2 + $0x38] sm:$0xff] %vm851, %v1141
      %1158 = vst.msk [vmem:[%s2 + $0x40] sm:$0xff] %vm851, %v1142
      %1159 = vst.msk [vmem:[%s2 + $0x48] sm:$0xff] %vm851, %v1143
      %1160 = vst.msk [vmem:[%s2 + $0x50] sm:$0xff] %vm851, %v1144
      %1161 = vst.msk [vmem:[%s2 + $0x58] sm:$0xff] %vm851, %v1145
      %1162 = vst.msk [vmem:[%s2 + $0x60] sm:$0xff] %vm851, %v1146
      %1163 = vst.msk [vmem:[%s2 + $0x68] sm:$0xff] %vm851, %v1147
      %1164 = vst.msk [vmem:[%s2 + $0x70] sm:$0xff] %vm851, %v1148
      %1165 = vst.msk [vmem:[%s2 + $0x78] sm:$0xff] %vm851, %v1149
    $region29: #{tpu_custom_call.1} parent=1 // pred_fallthru
      _
    // Predicated region
    $region30: #{tpu_custom_call.1} parent=1 // pred_check
      _
    $region31: #{tpu_custom_call.1} parent=1 // pred_check_branch
      %1167 = sbr.rel (0) target = $region33
    $region32: #{tpu_custom_call.1} parent=1 // pred_region
      _
    $region33: #{tpu_custom_call.1} parent=1 // pred_fallthru
      _
    // Predicated region
    $region34: #{tpu_custom_call.1} parent=1 // pred_check
      _
    $region35: #{tpu_custom_call.1} parent=1 // pred_check_branch
      %1169 = sbr.rel (0) target = $region37
    $region36: #{tpu_custom_call.1} parent=1 // pred_region
      _
    $region37: #{tpu_custom_call.1} parent=1 // pred_fallthru
      _
    %1170 = vsyncpa [#allocation7], 1
    %1171 = vsyncpa [#allocation9], 1

</llo_original>
